<compile_context>
chip_gen: v6e
topology: v6e:2x2x1
jax: 0.10.0
libtpu: 0.0.40
codegen_flags: <defaults>
</compile_context>

<pallas_src>
import math

import numpy as np
import jax
import jax.numpy as jnp
from jax.experimental import pallas as pl
from jax.experimental.pallas import tpu as pltpu


def _round_up(x, m):
    return ((x + m - 1) // m) * m


def _pe3d_kernel(fx_ref, fy_ref, fz_ref, ph_ref, pos_ref, out_ref):
    # fx/fy/fz/ph : (orig_ch, 1) f32 -- resident per-channel tables
    # pos_ref     : (3, TILE_N)  f32 -- xyz rows for one batch / one point tile
    # out_ref     : (orig_ch, TILE_N) -- channel-major output tile
    x = pos_ref[0:1, :]                                     # (1, TILE_N)
    y = pos_ref[1:2, :]
    z = pos_ref[2:3, :]
    # Broadcasts: (orig_ch,1) x (1,TILE_N) -> (orig_ch,TILE_N); pure VPU work
    # plus a single EUP sin per output element, then one full-tile store.
    arg = x * fx_ref[...] + y * fy_ref[...] + z * fz_ref[...] + ph_ref[...]
    out_ref[...] = jnp.sin(arg).astype(out_ref.dtype)


def positional_encoding_3d(positions, orig_ch, *, tile_n=2048,
                           out_dtype=jnp.float32):
    """positions: (B, N, 3) float -> (B, orig_ch, N) out_dtype."""
    positions = positions.astype(jnp.float32)
    b, n, three = positions.shape
    assert three == 3

    # --- parameter setup identical to the PyTorch __init__ ---
    channels = int(math.ceil(orig_ch / 6) * 2)
    if channels % 2:
        channels += 1
    half = channels // 2
    inv_freq = (
        1.0 / (10000.0 ** (np.arange(0, channels, 2, dtype=np.float32) / channels))
    ).astype(np.float32)                                      # (half,)

    # --- per-channel tables so the kernel is one aligned full-tile store ---
    # Reference channel layout: for axis a in (x,y,z), channels
    # [a*channels, a*channels+half) = sin, [a*channels+half, (a+1)*channels) = cos.
    c = np.arange(orig_ch)
    axis_id = c // channels                                    # 0,1,2
    r = c % channels
    is_cos = r >= half
    j = np.where(is_cos, r - half, r)
    freq_c = inv_freq[j].astype(np.float32)                    # (orig_ch,)
    ph = np.where(is_cos, np.float32(np.pi / 2), np.float32(0.0)).astype(np.float32)
    fx = np.where(axis_id == 0, freq_c, np.float32(0.0)).astype(np.float32)
    fy = np.where(axis_id == 1, freq_c, np.float32(0.0)).astype(np.float32)
    fz = np.where(axis_id == 2, freq_c, np.float32(0.0)).astype(np.float32)
    fx_j = jnp.asarray(fx.reshape(orig_ch, 1))
    fy_j = jnp.asarray(fy.reshape(orig_ch, 1))
    fz_j = jnp.asarray(fz.reshape(orig_ch, 1))
    ph_j = jnp.asarray(ph.reshape(orig_ch, 1))

    # --- tiling of the point axis (lanes). No padding / no output slice:
    # ragged last block is masked by Pallas on writeback.
    tile_n = int(tile_n)
    if n <= tile_n:
        tile_n = n                       # single block == full dim (always legal)
    else:
        tile_n = _round_up(tile_n, 128)  # lane-aligned multi-tile path
    num_tiles = pl.cdiv(n, tile_n)

    pos_t = jnp.transpose(positions, (0, 2, 1))                # (B, 3, N)

    # VMEM: double-buffered in/out blocks + tables + headroom.
    block_bytes = 4 * (orig_ch + 3) * tile_n
    vmem_limit = int(min(100 * 1024 * 1024,
                         2 * 2 * block_bytes + 4 * 4 * orig_ch + (2 << 20)))

    cost = pl.CostEstimate(
        flops=6 * b * orig_ch * n,
        transcendentals=b * orig_ch * n,
        bytes_accessed=4 * (b * orig_ch * n + b * 3 * n + 4 * orig_ch),
    )

    out = pl.pallas_call(
        _pe3d_kernel,
        out_shape=jax.ShapeDtypeStruct((b, orig_ch, n), out_dtype),
        grid=(b, num_tiles),
        in_specs=[
            pl.BlockSpec((orig_ch, 1), lambda i, j: (0, 0)),       # fx (resident)
            pl.BlockSpec((orig_ch, 1), lambda i, j: (0, 0)),       # fy
            pl.BlockSpec((orig_ch, 1), lambda i, j: (0, 0)),       # fz
            pl.BlockSpec((orig_ch, 1), lambda i, j: (0, 0)),       # phase
            pl.BlockSpec((None, 3, tile_n), lambda i, j: (i, 0, j)),
        ],
        out_specs=pl.BlockSpec((None, orig_ch, tile_n), lambda i, j: (i, 0, j)),
        compiler_params=pltpu.CompilerParams(
            dimension_semantics=("parallel", "parallel"),  # megacore-shardable
            vmem_limit_bytes=vmem_limit,
        ),
        cost_estimate=cost,
    )(fx_j, fy_j, fz_j, ph_j, pos_t)
    return out


def _reference(positions, orig_ch):
    """Pure-JAX replica of the PyTorch forward for verification."""
    positions = positions.astype(jnp.float32)
    channels = int(math.ceil(orig_ch / 6) * 2)
    if channels % 2:
        channels += 1
    inv_freq = 1.0 / (
        10000.0 ** (jnp.arange(0, channels, 2, dtype=jnp.float32) / channels)
    )
    pos_x, pos_y, pos_z = positions[:, :, 0], positions[:, :, 1], positions[:, :, 2]
    sx = jnp.einsum("bi,j->bij", pos_x, inv_freq)
    sy = jnp.einsum("bi,j->bij", pos_y, inv_freq)
    sz = jnp.einsum("bi,j->bij", pos_z, inv_freq)
    ex = jnp.concatenate([jnp.sin(sx), jnp.cos(sx)], axis=-1)
    ey = jnp.concatenate([jnp.sin(sy), jnp.cos(sy)], axis=-1)
    ez = jnp.concatenate([jnp.sin(sz), jnp.cos(sz)], axis=-1)
    emb = jnp.concatenate([ex, ey, ez], axis=-1)
    return jnp.transpose(emb[:, :, :orig_ch], (0, 2, 1))


if __name__ == "__main__":
    key = jax.random.PRNGKey(0)
    k_small, k_big = jax.random.split(key)

    # Small demo shapes (matches the module's expected (B, N, 3) input).
    B, N, ORIG_CH = 2, 16, 32
    positions = jax.random.uniform(k_small, (B, N, 3), jnp.float32,
                                   minval=0.0, maxval=10.0)
    out = jax.block_until_ready(positional_encoding_3d(positions, ORIG_CH))
    ref = jax.block_until_ready(_reference(positions, ORIG_CH))
    assert out.shape == (B, ORIG_CH, N), out.shape
    assert jnp.allclose(out, ref, atol=2e-5, rtol=2e-5), "mismatch (small)"

    # Larger shape exercising the multi-tile + ragged-last-block path
    # (N not a multiple of the tile size, orig_ch realistic for Mask3D).
    B2, N2, CH2 = 2, 2500, 128
    positions2 = jax.random.uniform(k_big, (B2, N2, 3), jnp.float32,
                                    minval=0.0, maxval=10.0)
    out2 = jax.block_until_ready(positional_encoding_3d(positions2, CH2))
    ref2 = jax.block_until_ready(_reference(positions2, CH2))
    assert out2.shape == (B2, CH2, N2), out2.shape
    assert jnp.allclose(out2, ref2, atol=2e-5, rtol=2e-5), "mismatch (tiled)"

    print("KERNEL_OK")
</pallas_src>

<mosaic_0001>
module attributes {stable_mosaic.version = 11 : i64} {
  func.func @_pe3d_kernel(%arg0: i32, %arg1: i32, %arg2: memref<32x1xf32, #tpu.memory_space<vmem>>, %arg3: memref<32x1xf32, #tpu.memory_space<vmem>>, %arg4: memref<32x1xf32, #tpu.memory_space<vmem>>, %arg5: memref<32x1xf32, #tpu.memory_space<vmem>>, %arg6: memref<1x3x16xf32, #tpu.memory_space<vmem>>, %arg7: memref<1x32x16xf32, #tpu.memory_space<vmem>>) attributes {dimension_semantics = [#tpu.dimension_semantics<parallel>, #tpu.dimension_semantics<parallel>], iteration_bounds = array<i64: 2, 1>, scalar_prefetch = 0 : i64, scratch_operands = 0 : i64, tpu.core_type = #tpu.core_type<tc>, window_params = [{pipeline_mode = #tpu.pipeline_mode<synchronous>, transform_indices = @transform_0, window_bounds = array<i64: 32, 1>}, {pipeline_mode = #tpu.pipeline_mode<synchronous>, transform_indices = @transform_1, window_bounds = array<i64: 32, 1>}, {pipeline_mode = #tpu.pipeline_mode<synchronous>, transform_indices = @transform_2, window_bounds = array<i64: 32, 1>}, {pipeline_mode = #tpu.pipeline_mode<synchronous>, transform_indices = @transform_3, window_bounds = array<i64: 32, 1>}, {transform_indices = @transform_4, window_bounds = array<i64: 1, 3, 16>}, {transform_indices = @transform_5, window_bounds = array<i64: 1, 32, 16>}]} {
    %c0 = arith.constant 0 : index
    %c0_0 = arith.constant 0 : index
    %c0_1 = arith.constant 0 : index
    %0 = vector.load %arg6[%c0, %c0_0, %c0_1] : memref<1x3x16xf32, #tpu.memory_space<vmem>>, vector<1x1x16xf32>
    %1 = vector.shape_cast %0 : vector<1x1x16xf32> to vector<1x16xf32>
    %c0_2 = arith.constant 0 : index
    %c1 = arith.constant 1 : index
    %c0_3 = arith.constant 0 : index
    %2 = vector.load %arg6[%c0_2, %c1, %c0_3] : memref<1x3x16xf32, #tpu.memory_space<vmem>>, vector<1x1x16xf32>
    %3 = vector.shape_cast %2 : vector<1x1x16xf32> to vector<1x16xf32>
    %c0_4 = arith.constant 0 : index
    %c2 = arith.constant 2 : index
    %c0_5 = arith.constant 0 : index
    %4 = vector.load %arg6[%c0_4, %c2, %c0_5] : memref<1x3x16xf32, #tpu.memory_space<vmem>>, vector<1x1x16xf32>
    %5 = vector.shape_cast %4 : vector<1x1x16xf32> to vector<1x16xf32>
    %c0_6 = arith.constant 0 : index
    %c0_7 = arith.constant 0 : index
    %6 = vector.load %arg2[%c0_6, %c0_7] : memref<32x1xf32, #tpu.memory_space<vmem>>, vector<32x1xf32>
    %7 = vector.broadcast %1 : vector<1x16xf32> to vector<32x16xf32>
    %8 = vector.broadcast %6 : vector<32x1xf32> to vector<32x16xf32>
    %9 = arith.mulf %7, %8 : vector<32x16xf32>
    %c0_8 = arith.constant 0 : index
    %c0_9 = arith.constant 0 : index
    %10 = vector.load %arg3[%c0_8, %c0_9] : memref<32x1xf32, #tpu.memory_space<vmem>>, vector<32x1xf32>
    %11 = vector.broadcast %3 : vector<1x16xf32> to vector<32x16xf32>
    %12 = vector.broadcast %10 : vector<32x1xf32> to vector<32x16xf32>
    %13 = arith.mulf %11, %12 : vector<32x16xf32>
    %14 = arith.addf %9, %13 : vector<32x16xf32>
    %c0_10 = arith.constant 0 : index
    %c0_11 = arith.constant 0 : index
    %15 = vector.load %arg4[%c0_10, %c0_11] : memref<32x1xf32, #tpu.memory_space<vmem>>, vector<32x1xf32>
    %16 = vector.broadcast %5 : vector<1x16xf32> to vector<32x16xf32>
    %17 = vector.broadcast %15 : vector<32x1xf32> to vector<32x16xf32>
    %18 = arith.mulf %16, %17 : vector<32x16xf32>
    %19 = arith.addf %14, %18 : vector<32x16xf32>
    %c0_12 = arith.constant 0 : index
    %c0_13 = arith.constant 0 : index
    %20 = vector.load %arg5[%c0_12, %c0_13] : memref<32x1xf32, #tpu.memory_space<vmem>>, vector<32x1xf32>
    %21 = vector.broadcast %20 : vector<32x1xf32> to vector<32x16xf32>
    %22 = arith.addf %19, %21 : vector<32x16xf32>
    %23 = math.sin %22 : vector<32x16xf32>
    %c0_14 = arith.constant 0 : index
    %c0_15 = arith.constant 0 : index
    %c0_16 = arith.constant 0 : index
    %24 = vector.load %arg7[%c0_14, %c0_15, %c0_16] : memref<1x32x16xf32, #tpu.memory_space<vmem>>, vector<1x32x16xf32>
    %25 = vector.shape_cast %24 : vector<1x32x16xf32> to vector<32x16xf32>
    %26 = vector.shape_cast %23 : vector<32x16xf32> to vector<1x32x16xf32>
    tpu.vector_store %arg7[%c0_14, %c0_15, %c0_16], %26 {strides = array<i32>} : memref<1x32x16xf32, #tpu.memory_space<vmem>>, vector<1x32x16xf32>,
    return
  }
  func.func @transform_0(%arg0: i32, %arg1: i32) -> (i32, i32) {
    %c0_i32 = arith.constant 0 : i32
    %c0_i32_0 = arith.constant 0 : i32
    %c0_i32_1 = arith.constant 0 : i32
    return %c0_i32, %c0_i32_0 : i32, i32
  }
  func.func @transform_1(%arg0: i32, %arg1: i32) -> (i32, i32) {
    %c0_i32 = arith.constant 0 : i32
    %c0_i32_0 = arith.constant 0 : i32
    %c0_i32_1 = arith.constant 0 : i32
    return %c0_i32, %c0_i32_0 : i32, i32
  }
  func.func @transform_2(%arg0: i32, %arg1: i32) -> (i32, i32) {
    %c0_i32 = arith.constant 0 : i32
    %c0_i32_0 = arith.constant 0 : i32
    %c0_i32_1 = arith.constant 0 : i32
    return %c0_i32, %c0_i32_0 : i32, i32
  }
  func.func @transform_3(%arg0: i32, %arg1: i32) -> (i32, i32) {
    %c0_i32 = arith.constant 0 : i32
    %c0_i32_0 = arith.constant 0 : i32
    %c0_i32_1 = arith.constant 0 : i32
    return %c0_i32, %c0_i32_0 : i32, i32
  }
  func.func @transform_4(%arg0: i32, %arg1: i32) -> (i32, i32, i32) {
    %c0_i32 = arith.constant 0 : i32
    %c0_i32_0 = arith.constant 0 : i32
    return %arg0, %c0_i32, %arg1 : i32, i32, i32
  }
  func.func @transform_5(%arg0: i32, %arg1: i32) -> (i32, i32, i32) {
    %c0_i32 = arith.constant 0 : i32
    %c0_i32_0 = arith.constant 0 : i32
    return %arg0, %c0_i32, %arg1 : i32, i32, i32
  }
}

</mosaic_0001>

<llo_original>
// kernel: tpu_custom_call.1
$region0: #{tpu_custom_call.1}
  #allocation0 [shape = 'u32[]', space=smem, size = 0x4, offset = 0x4, fixed_abs, tag = 'smem constant byte address 0x4 - core index']
  #allocation1 [shape = 'u32[144,128]{1,0:T(1,128)}', space=vmem, size = 0x12000, scoped, tag = 'internal scratch']
  %s0 = inlined_call_operand.vmem [shape: f32[32,1], index: 0, kind: input, shape index: {}]
  %s1 = inlined_call_operand.vmem [shape: f32[32,1], index: 1, kind: input, shape index: {}]
  %s2 = inlined_call_operand.vmem [shape: f32[32,1], index: 2, kind: input, shape index: {}]
  %s3 = inlined_call_operand.vmem [shape: f32[32,1], index: 3, kind: input, shape index: {}]
  %s4 = inlined_call_operand.vmem [shape: f32[2,3,16], index: 4, kind: input, shape index: {}]
  %s5 = inlined_call_operand.vmem [shape: f32[2,32,16], index: 5, kind: output, shape index: {}]
  %s6 = sld [smem:[#allocation0]]
  $region53: #{tpu_custom_call.1} parent=0
    _
  %s8 = ssub.s32 1, %s6
  %s9 = scalar_select 0, %s8, %s6
  loop: start=0, step=1, limit=4
  $region2: #{tpu_custom_call.1} parent=0 // loop_pre_header
    _
  $region3: #{tpu_custom_call.1} parent=0 // loop_header
    %s11 = sphi 0, %s15
    %p12 = scmp.ge.s32.totalorder %s11, 4
    %s18 = sphi 0, %s30
    %s19 = sphi 0, %s26
    %s20 = sphi 0, %s18
    %s21 = sphi 0, %s19
    %s22 = sphi 0, %s20
    %s23 = sphi 0, %s21
    %s31 = sphi 0, %s31
    %s33 = sphi 0, %s31
    %s34 = sphi 0, %s33
    %s48 = sphi 0, %s34
    %s52 = sphi 0, %s52
    %s54 = sphi 0, %s52
    %s55 = sphi 0, %s54
    %s69 = sphi 0, %s55
    %s73 = sphi 0, %s73
    %s75 = sphi 0, %s73
    %s76 = sphi 0, %s75
    %s90 = sphi 0, %s76
    %s94 = sphi 0, %s94
    %s96 = sphi 0, %s94
    %s97 = sphi 0, %s96
    %s111 = sphi 0, %s97
    %s119 = sphi 0, %s121
    %s122 = sphi 0, %s119
    %s123 = sphi 0, %s122
    %s139 = sphi 0, %s123
    %s147 = sphi 0, %s149
    %s150 = sphi 0, %s147
    %s151 = sphi 0, %s150
    %s167 = sphi 0, %s151
  $region4: #{tpu_custom_call.1} parent=0 // loop_header_branch
    %14 = sbr.rel (%p12) target = $region8
  $region5: #{tpu_custom_call.1} parent=0 // loop_body
    %s16 = ssub.s32 %s11, 1
    %s17 = ssub.s32 %s11, 2
    %s24 = sadd.s32 1, %s19
    %p25 = scmp.ge.s32.totalorder %s24, 1
    %s26 = scalar_select %p25, 0, %s24
    %s27 = sadd.s32 1, %s18
    %s28 = scalar_select %p25, %s27, %s18
    %p29 = scmp.ge.s32.totalorder %s28, 2
    %s30 = scalar_select %p29, 0, %s28
    %s32 = sadd.s32 %s31, 1
    %p35 = scmp.eq.s32.totalorder %s11, 1
    %p36 = scmp.ne.s32.totalorder %s31, %s33
    %p37 = scmp.eq.s32.totalorder %s11, 0
    %p38 = por %p36, %p37
    %p39 = scmp.ne.s32.totalorder %s31, %s33
    %p40 = scmp.eq.s32.totalorder %s16, 1
    %p41 = por %p39, %p40
    %p42 = scmp.ne.s32.totalorder %s33, %s34
    %p43 = scmp.eq.s32.totalorder %s16, 0
    %p44 = por %p42, %p43
    %p45 = scmp.ne.s32.totalorder %s33, %s34
    %p46 = scmp.eq.s32.totalorder %s17, 1
    %p47 = por %p45, %p46
    %p49 = scmp.ne.s32.totalorder %s34, %s48
    %p50 = scmp.eq.s32.totalorder %s17, 0
    %p51 = por %p49, %p50
    %s53 = sadd.s32 %s52, 1
    %p56 = scmp.eq.s32.totalorder %s11, 1
    %p57 = scmp.ne.s32.totalorder %s52, %s54
    %p58 = scmp.eq.s32.totalorder %s11, 0
    %p59 = por %p57, %p58
    %p60 = scmp.ne.s32.totalorder %s52, %s54
    %p61 = scmp.eq.s32.totalorder %s16, 1
    %p62 = por %p60, %p61
    %p63 = scmp.ne.s32.totalorder %s54, %s55
    %p64 = scmp.eq.s32.totalorder %s16, 0
    %p65 = por %p63, %p64
    %p66 = scmp.ne.s32.totalorder %s54, %s55
    %p67 = scmp.eq.s32.totalorder %s17, 1
    %p68 = por %p66, %p67
    %p70 = scmp.ne.s32.totalorder %s55, %s69
    %p71 = scmp.eq.s32.totalorder %s17, 0
    %p72 = por %p70, %p71
    %s74 = sadd.s32 %s73, 1
    %p77 = scmp.eq.s32.totalorder %s11, 1
    %p78 = scmp.ne.s32.totalorder %s73, %s75
    %p79 = scmp.eq.s32.totalorder %s11, 0
    %p80 = por %p78, %p79
    %p81 = scmp.ne.s32.totalorder %s73, %s75
    %p82 = scmp.eq.s32.totalorder %s16, 1
    %p83 = por %p81, %p82
    %p84 = scmp.ne.s32.totalorder %s75, %s76
    %p85 = scmp.eq.s32.totalorder %s16, 0
    %p86 = por %p84, %p85
    %p87 = scmp.ne.s32.totalorder %s75, %s76
    %p88 = scmp.eq.s32.totalorder %s17, 1
    %p89 = por %p87, %p88
    %p91 = scmp.ne.s32.totalorder %s76, %s90
    %p92 = scmp.eq.s32.totalorder %s17, 0
    %p93 = por %p91, %p92
    %s95 = sadd.s32 %s94, 1
    %p98 = scmp.eq.s32.totalorder %s11, 1
    %p99 = scmp.ne.s32.totalorder %s94, %s96
    %p100 = scmp.eq.s32.totalorder %s11, 0
    %p101 = por %p99, %p100
    %p102 = scmp.ne.s32.totalorder %s94, %s96
    %p103 = scmp.eq.s32.totalorder %s16, 1
    %p104 = por %p102, %p103
    %p105 = scmp.ne.s32.totalorder %s96, %s97
    %p106 = scmp.eq.s32.totalorder %s16, 0
    %p107 = por %p105, %p106
    %p108 = scmp.ne.s32.totalorder %s96, %s97
    %p109 = scmp.eq.s32.totalorder %s17, 1
    %p110 = por %p108, %p109
    %p112 = scmp.ne.s32.totalorder %s97, %s111
    %p113 = scmp.eq.s32.totalorder %s17, 0
    %p114 = por %p112, %p113
    %s115 = ssub.s32 %s18, %s30
    %s116 = ssub.s32 %s19, %s26
    %s117 = sor.u32 %s115, %s116
    %p118 = scmp.eq.s32.totalorder %s117, 0
    %s120 = sadd.s32 %s119, 1
    %s121 = scalar_select %p118, %s119, %s120
    %p124 = pneg %p118
    %p125 = scmp.eq.s32.totalorder %s11, 1
    %p126 = por %p124, %p125
    %p127 = scmp.ne.s32.totalorder %s119, %s122
    %p128 = scmp.eq.s32.totalorder %s11, 0
    %p129 = por %p127, %p128
    %p130 = scmp.ne.s32.totalorder %s119, %s122
    %p131 = scmp.eq.s32.totalorder %s16, 1
    %p132 = por %p130, %p131
    %p133 = scmp.ne.s32.totalorder %s122, %s123
    %p134 = scmp.eq.s32.totalorder %s16, 0
    %p135 = por %p133, %p134
    %p136 = scmp.ne.s32.totalorder %s122, %s123
    %p137 = scmp.eq.s32.totalorder %s17, 1
    %p138 = por %p136, %p137
    %p140 = scmp.ne.s32.totalorder %s123, %s139
    %p141 = scmp.eq.s32.totalorder %s17, 0
    %p142 = por %p140, %p141
    %s143 = ssub.s32 %s18, %s30
    %s144 = ssub.s32 %s19, %s26
    %s145 = sor.u32 %s143, %s144
    %p146 = scmp.eq.s32.totalorder %s145, 0
    %s148 = sadd.s32 %s147, 1
    %s149 = scalar_select %p146, %s147, %s148
    %p152 = pneg %p146
    %p153 = scmp.eq.s32.totalorder %s11, 1
    %p154 = por %p152, %p153
    %p155 = scmp.ne.s32.totalorder %s147, %s150
    %p156 = scmp.eq.s32.totalorder %s11, 0
    %p157 = por %p155, %p156
    %p158 = scmp.ne.s32.totalorder %s147, %s150
    %p159 = scmp.eq.s32.totalorder %s16, 1
    %p160 = por %p158, %p159
    %p161 = scmp.ne.s32.totalorder %s150, %s151
    %p162 = scmp.eq.s32.totalorder %s16, 0
    %p163 = por %p161, %p162
    %p164 = scmp.ne.s32.totalorder %s150, %s151
    %p165 = scmp.eq.s32.totalorder %s17, 1
    %p166 = por %p164, %p165
    %p168 = scmp.ne.s32.totalorder %s151, %s167
    %p169 = scmp.eq.s32.totalorder %s17, 0
    %p170 = por %p168, %p169
    %p171 = scmp.le.s32.totalorder 1, %s11
    %p172 = scmp.lt.s32.totalorder %s11, 3
    %p173 = pnand %p171, %p172
    %p174 = pneg %p173
    // Predicated region
    $region9: #{tpu_custom_call.1} parent=5 // pred_check
      _
    $region10: #{tpu_custom_call.1} parent=5 // pred_check_branch
      %176 = sbr.rel (%p173) target = $region12
    $region11: #{tpu_custom_call.1} parent=5 // pred_region
      %s177 = ssub.s32 %s11, 1
      // Predicated region
      $region13: #{tpu_custom_call.1} parent=11 // pred_check
        %p178 = pneg %p44
      $region14: #{tpu_custom_call.1} parent=11 // pred_check_branch
        %180 = sbr.rel (%p178) target = $region16
      $region15: #{tpu_custom_call.1} parent=11 // pred_region
        _
      $region16: #{tpu_custom_call.1} parent=11 // pred_fallthru
        _
      // Predicated region
      $region17: #{tpu_custom_call.1} parent=11 // pred_check
        %p181 = pneg %p65
      $region18: #{tpu_custom_call.1} parent=11 // pred_check_branch
        %183 = sbr.rel (%p181) target = $region20
      $region19: #{tpu_custom_call.1} parent=11 // pred_region
        _
      $region20: #{tpu_custom_call.1} parent=11 // pred_fallthru
        _
      // Predicated region
      $region21: #{tpu_custom_call.1} parent=11 // pred_check
        %p184 = pneg %p86
      $region22: #{tpu_custom_call.1} parent=11 // pred_check_branch
        %186 = sbr.rel (%p184) target = $region24
      $region23: #{tpu_custom_call.1} parent=11 // pred_region
        _
      $region24: #{tpu_custom_call.1} parent=11 // pred_fallthru
        _
      // Predicated region
      $region25: #{tpu_custom_call.1} parent=11 // pred_check
        %p187 = pneg %p107
      $region26: #{tpu_custom_call.1} parent=11 // pred_check_branch
        %189 = sbr.rel (%p187) target = $region28
      $region27: #{tpu_custom_call.1} parent=11 // pred_region
        _
      $region28: #{tpu_custom_call.1} parent=11 // pred_fallthru
        _
    $region12: #{tpu_custom_call.1} parent=5 // pred_fallthru
      _
    %p190 = scmp.lt.s32.totalorder %s11, 2
    // Predicated region
    $region29: #{tpu_custom_call.1} parent=5 // pred_check
      %p191 = pneg %p190
    $region30: #{tpu_custom_call.1} parent=5 // pred_check_branch
      %193 = sbr.rel (%p191) target = $region32
    $region31: #{tpu_custom_call.1} parent=5 // pred_region
      // Predicated region
      $region33: #{tpu_custom_call.1} parent=31 // pred_check
        %p194 = pneg %p129
      $region34: #{tpu_custom_call.1} parent=31 // pred_check_branch
        %196 = sbr.rel (%p194) target = $region36
      $region35: #{tpu_custom_call.1} parent=31 // pred_region
        %p197 = scmp.lt.s32.totalorder %s18, 1
        %s198 = scalar_select %p197, %s18, 1
        %p199 = scmp.lt.s32.totalorder %s19, 0
        %s200 = scalar_select %p199, %s19, 0
        %s201 = sadd.s32 %s200, %s198
        %s202 = smul.addr %s201, 4
        %s203 = scalar_lea.vmem %s4, %s202
      $region36: #{tpu_custom_call.1} parent=31 // pred_fallthru
        _
    $region32: #{tpu_custom_call.1} parent=5 // pred_fallthru
      _
    %p204 = scmp.le.s32.totalorder 1, %s11
    %p205 = scmp.lt.s32.totalorder %s11, 3
    %p206 = pnand %p204, %p205
    %p207 = pneg %p206
    // Predicated region
    $region37: #{tpu_custom_call.1} parent=5 // pred_check
      _
    $region38: #{tpu_custom_call.1} parent=5 // pred_check_branch
      %209 = sbr.rel (%p206) target = $region40
    $region39: #{tpu_custom_call.1} parent=5 // pred_region
      %s210 = ssub.s32 %s11, 1
      %p211 = pneg %p44
      %p212 = pneg %p41
      %p213 = pneg %p65
      %p214 = pneg %p62
      %p215 = pneg %p86
      %p216 = pneg %p83
      %p217 = pneg %p107
      %p218 = pneg %p104
      %p219 = scmp.lt.s32.totalorder %s20, 1
      %s220 = scalar_select %p219, %s20, 1
      %p221 = scmp.lt.s32.totalorder %s21, 0
      %s222 = scalar_select %p221, %s21, 0
      %s223 = sadd.s32 %s222, %s220
      %s224 = smul.addr %s223, 4
      %s225 = scalar_lea.vmem %s4, %s224
      %p226 = pneg %p135
      %p227 = pneg %p132
      %p228 = pneg %p163
      %p229 = pneg %p160
      %p230 = scmp.lt.s32.totalorder %s20, 1
      %s231 = scalar_select %p230, %s20, 1
      %p232 = scmp.lt.s32.totalorder %s21, 0
      %s233 = scalar_select %p232, %s21, 0
      %s234 = smul.addr %s231, 4
      %s235 = sadd.s32 %s233, %s234
      %s236 = smul.addr %s235, 8
      %s237 = scalar_lea.vmem %s5, %s236
      %p238 = scmp.lt.s32.totalorder %s20, 1
      %s239 = scalar_select %p238, %s20, 1
      %p240 = scmp.lt.s32.totalorder %s21, 0
      %s241 = scalar_select %p240, %s21, 0
      %s242 = sadd.s32 %s241, %s239
      %s243 = smul.addr %s242, 4
      %s244 = scalar_lea.vmem %s4, %s243
      %p245 = scmp.lt.s32.totalorder %s20, 1
      %s246 = scalar_select %p245, %s20, 1
      %p247 = scmp.lt.s32.totalorder %s21, 0
      %s248 = scalar_select %p247, %s21, 0
      %s249 = smul.addr %s246, 4
      %s250 = sadd.s32 %s248, %s249
      %s251 = smul.addr %s250, 8
      %s252 = scalar_lea.vmem %s5, %s251
      %v253 = vld [vmem:[%s244] sm:$0x1]
      %v254 = vld [vmem:[%s244 + $0x1] sm:$0x1]
      %v255 = vld [vmem:[%s244 + $0x2] sm:$0x1]
      %v256 = vld [vmem:[%s0] sm:$0xff]
      %v257 = vld [vmem:[%s0 + $0x8] sm:$0xff]
      %v258 = vld [vmem:[%s0 + $0x10] sm:$0xff]
      %v259 = vld [vmem:[%s0 + $0x18] sm:$0xff]
      %v260 = vlaneseq
      %v261 = vshrl.u32 %v260, 7
      %v262 = vsub.s32 0, %v261
      %v263 = vrot.slane %v253, %v262
      %265 = vset.pattern.permute.xlu0 0
      %266 = vperm.xlu0 %265, %v256
      %v267 = vpop.permute.xlu0 %266
      %270 = vset.pattern.permute.xlu0 0
      %271 = vperm.xlu0 %270, %v257
      %v272 = vpop.permute.xlu0 %271
      %275 = vset.pattern.permute.xlu0 0
      %276 = vperm.xlu0 %275, %v258
      %v277 = vpop.permute.xlu0 %276
      %280 = vset.pattern.permute.xlu0 0
      %281 = vperm.xlu0 %280, %v259
      %v282 = vpop.permute.xlu0 %281
      %v284 = vmul.f32 %v263, %v267
      %v285 = vmul.f32 %v263, %v272
      %v286 = vmul.f32 %v263, %v277
      %v287 = vmul.f32 %v263, %v282
      %v288 = vld [vmem:[%s1] sm:$0xff]
      %v289 = vld [vmem:[%s1 + $0x8] sm:$0xff]
      %v290 = vld [vmem:[%s1 + $0x10] sm:$0xff]
      %v291 = vld [vmem:[%s1 + $0x18] sm:$0xff]
      %v292 = vlaneseq
      %v293 = vshrl.u32 %v292, 7
      %v294 = vsub.s32 0, %v293
      %v295 = vrot.slane %v254, %v294
      %297 = vset.pattern.permute.xlu0 0
      %298 = vperm.xlu0 %297, %v288
      %v299 = vpop.permute.xlu0 %298
      %302 = vset.pattern.permute.xlu0 0
      %303 = vperm.xlu0 %302, %v289
      %v304 = vpop.permute.xlu0 %303
      %307 = vset.pattern.permute.xlu0 0
      %308 = vperm.xlu0 %307, %v290
      %v309 = vpop.permute.xlu0 %308
      %312 = vset.pattern.permute.xlu0 0
      %313 = vperm.xlu0 %312, %v291
      %v314 = vpop.permute.xlu0 %313
      %v316 = vmul.f32 %v295, %v299
      %v317 = vmul.f32 %v295, %v304
      %v318 = vmul.f32 %v295, %v309
      %v319 = vmul.f32 %v295, %v314
      %v320 = vadd.f32 %v284, %v316
      %v321 = vadd.f32 %v285, %v317
      %v322 = vadd.f32 %v286, %v318
      %v323 = vadd.f32 %v287, %v319
      %v324 = vld [vmem:[%s2] sm:$0xff]
      %v325 = vld [vmem:[%s2 + $0x8] sm:$0xff]
      %v326 = vld [vmem:[%s2 + $0x10] sm:$0xff]
      %v327 = vld [vmem:[%s2 + $0x18] sm:$0xff]
      %v328 = vlaneseq
      %v329 = vshrl.u32 %v328, 7
      %v330 = vsub.s32 0, %v329
      %v331 = vrot.slane %v255, %v330
      %333 = vset.pattern.permute.xlu0 0
      %334 = vperm.xlu0 %333, %v324
      %v335 = vpop.permute.xlu0 %334
      %338 = vset.pattern.permute.xlu0 0
      %339 = vperm.xlu0 %338, %v325
      %v340 = vpop.permute.xlu0 %339
      %343 = vset.pattern.permute.xlu0 0
      %344 = vperm.xlu0 %343, %v326
      %v345 = vpop.permute.xlu0 %344
      %348 = vset.pattern.permute.xlu0 0
      %349 = vperm.xlu0 %348, %v327
      %v350 = vpop.permute.xlu0 %349
      %v352 = vmul.f32 %v331, %v335
      %v353 = vmul.f32 %v331, %v340
      %v354 = vmul.f32 %v331, %v345
      %v355 = vmul.f32 %v331, %v350
      %v356 = vadd.f32 %v320, %v352
      %v357 = vadd.f32 %v321, %v353
      %v358 = vadd.f32 %v322, %v354
      %v359 = vadd.f32 %v323, %v355
      %v360 = vld [vmem:[%s3] sm:$0xff]
      %v361 = vld [vmem:[%s3 + $0x8] sm:$0xff]
      %v362 = vld [vmem:[%s3 + $0x10] sm:$0xff]
      %v363 = vld [vmem:[%s3 + $0x18] sm:$0xff]
      %365 = vset.pattern.permute.xlu0 0
      %366 = vperm.xlu0 %365, %v360
      %v367 = vpop.permute.xlu0 %366
      %370 = vset.pattern.permute.xlu0 0
      %371 = vperm.xlu0 %370, %v361
      %v372 = vpop.permute.xlu0 %371
      %375 = vset.pattern.permute.xlu0 0
      %376 = vperm.xlu0 %375, %v362
      %v377 = vpop.permute.xlu0 %376
      %380 = vset.pattern.permute.xlu0 0
      %381 = vperm.xlu0 %380, %v363
      %v382 = vpop.permute.xlu0 %381
      %v384 = vadd.f32 %v356, %v367
      %v385 = vadd.f32 %v357, %v372
      %v386 = vadd.f32 %v358, %v377
      %v387 = vadd.f32 %v359, %v382
      %v388 = vand.u32 2147483647, %v384
      %vm389 = vcmp.le.f32.partialorder %v388, 0.7853982
      %vm390 = vcmp.lt.s32.totalorder %v384, 0
      %v391 = vand.u32 %v384, 2139095040
      %v392 = vshrl.u32 %v391, 23
      %v393 = vsub.s32 %v392, 127
      %v394 = vand.u32 2147483647, %v384
      %v395 = vand.u32 %v394, 8388607
      %v396 = vor.u32 %v395, 8388608
      %v397 = vsub.s32 0, %v396
      %v398 = vadd.s32 %v393, 1
      %vm399 = vcmp.gt.s32.totalorder %v398, 0
      %v400 = vsel %vm399, %v398, 0
      %v401 = vshrl.u32 %v400, 5
      %v402 = vand.u32 %v400, 31
      %v403 = vsub.s32 32, %v402
      %v404 = vshrl.u32 683565275, %v403
      %v405 = vshll.u32 683565275, %v402
      %v406 = vshrl.u32 2475754826, %v403
      %v407 = vor.u32 %v405, %v406
      %v408 = vshll.u32 2475754826, %v402
      %v409 = vshrl.u32 2131351028, %v403
      %v410 = vor.u32 %v408, %v409
      %v411 = vshll.u32 2131351028, %v402
      %v412 = vshrl.u32 2102212464, %v403
      %v413 = vor.u32 %v411, %v412
      %v414 = vshll.u32 2102212464, %v402
      %v415 = vshrl.u32 920167782, %v403
      %v416 = vor.u32 %v414, %v415
      %v417 = vshll.u32 920167782, %v402
      %v418 = vshrl.u32 1326507024, %v403
      %v419 = vor.u32 %v417, %v418
      %vm420 = vcmp.lt.s32.totalorder %v401, 1
      %vm421 = vcmp.lt.s32.totalorder %v401, 2
      %vm422 = vcmp.lt.s32.totalorder %v401, 3
      %vm423 = vcmp.lt.s32.totalorder %v401, 4
      %v424 = vsel %vm420, %v404, %v407
      %v425 = vsel %vm423, %v413, 2102212464
      %v426 = vsel %vm422, %v410, %v425
      %v427 = vsel %vm421, %v424, %v426
      %v428 = vsel %vm420, %v407, %v410
      %v429 = vsel %vm423, %v416, 920167782
      %v430 = vsel %vm422, %v413, %v429
      %v431 = vsel %vm421, %v428, %v430
      %v432 = vsel %vm420, %v410, %v413
      %v433 = vsel %vm423, %v419, 1326507024
      %v434 = vsel %vm422, %v416, %v433
      %v435 = vsel %vm421, %v432, %v434
      %v436 = vshll.u32 %v396, 8
      %v437 = vmul.u32.u64.compose %v436, %v435
      %v438 = vextract.low.u32 %v437
      %v439 = vextract.high.u32 %v437
      %v440 = vmul.u32.u64.compose %v436, %v431
      %v441 = vextract.low.u32 %v440
      %v442 = vextract.high.u32 %v440
      %v443 = vmul.u32 %v436, %v427
      %v444 = vadd.s32 %v439, %v441
      %vm445 = vc.u32 %v439, %v441
      %v446 = vadd.s32 %v442, 1
      %v447 = vsel %vm445, %v446, %v442
      %v448 = vadd.s32 %v443, %v447
      %v449 = vadd.s32 %v448, 536870912
      %v450 = vshrl.u32 %v449, 30
      %v451 = vshll.u32 %v450, 30
      %v452 = vsub.s32 %v448, %v451
      %vm453 = vcmp.lt.s32.totalorder %v452, 0
      %v454 = vsub.s32 0, %v452
      %v455 = vsel %vm453, %v454, %v452
      %v456 = vclz %v455
      %v457 = vsub.s32 %v456, 2
      %vm458 = vcmp.gt.s32.totalorder 0, %v457
      %v459 = vsel %vm458, 0, %v457
      %v460 = vsub.s32 32, %v459
      %v461 = vshll.u32 %v452, %v459
      %v462 = vshrl.u32 %v444, %v460
      %v463 = vor.u32 %v461, %v462
      %v464 = vsub.s32 4294967266, %v459
      %v465 = vadd.s32 %v464, 127
      %v466 = vshll.u32 %v465, 23
      %v467 = vor.u32 4788187, %v466
      %v468 = vand.u32 2147483647, %v467
      %v470 = vcvt.s32.f32 %v463
      %v471 = vmul.f32 %v470, %v468
      %v472 = vxor.u32 %v471, 2147483648
      %v473 = vsel %vm390, %v472, %v471
      %v474 = vsub.s32 4, %v450
      %v475 = vsel %vm390, %v474, %v450
      %v476 = vsel %vm389, %v384, %v473
      %v477 = vsel %vm389, 0, %v475
      %v478 = vcosq.f32.pop %v476
      %v479 = vsinq.f32.pop %v476
      %vm480 = vweird.f32 %v384
      %v481 = vadd.s32 %v477, 3
      %v482 = vand.u32 %v481, 3
      %vm483 = vcmp.lt.s32.totalorder %v482, 2
      %vm484 = vcmp.eq.s32.totalorder %v482, 0
      %v485 = vxor.u32 %v479, 2147483648
      %v486 = vsel %vm484, %v478, %v485
      %vm487 = vcmp.eq.s32.totalorder %v482, 2
      %v488 = vxor.u32 %v478, 2147483648
      %v489 = vsel %vm487, %v488, %v479
      %v490 = vsel %vm483, %v486, %v489
      %v491 = vsel %vm480, nan, %v490
      %v492 = vand.u32 2147483647, %v385
      %vm493 = vcmp.le.f32.partialorder %v492, 0.7853982
      %vm494 = vcmp.lt.s32.totalorder %v385, 0
      %v495 = vand.u32 %v385, 2139095040
      %v496 = vshrl.u32 %v495, 23
      %v497 = vsub.s32 %v496, 127
      %v498 = vand.u32 2147483647, %v385
      %v499 = vand.u32 %v498, 8388607
      %v500 = vor.u32 %v499, 8388608
      %v501 = vsub.s32 0, %v500
      %v502 = vadd.s32 %v497, 1
      %vm503 = vcmp.gt.s32.totalorder %v502, 0
      %v504 = vsel %vm503, %v502, 0
      %v505 = vshrl.u32 %v504, 5
      %v506 = vand.u32 %v504, 31
      %v507 = vsub.s32 32, %v506
      %v508 = vshrl.u32 683565275, %v507
      %v509 = vshll.u32 683565275, %v506
      %v510 = vshrl.u32 2475754826, %v507
      %v511 = vor.u32 %v509, %v510
      %v512 = vshll.u32 2475754826, %v506
      %v513 = vshrl.u32 2131351028, %v507
      %v514 = vor.u32 %v512, %v513
      %v515 = vshll.u32 2131351028, %v506
      %v516 = vshrl.u32 2102212464, %v507
      %v517 = vor.u32 %v515, %v516
      %v518 = vshll.u32 2102212464, %v506
      %v519 = vshrl.u32 920167782, %v507
      %v520 = vor.u32 %v518, %v519
      %v521 = vshll.u32 920167782, %v506
      %v522 = vshrl.u32 1326507024, %v507
      %v523 = vor.u32 %v521, %v522
      %vm524 = vcmp.lt.s32.totalorder %v505, 1
      %vm525 = vcmp.lt.s32.totalorder %v505, 2
      %vm526 = vcmp.lt.s32.totalorder %v505, 3
      %vm527 = vcmp.lt.s32.totalorder %v505, 4
      %v528 = vsel %vm524, %v508, %v511
      %v529 = vsel %vm527, %v517, 2102212464
      %v530 = vsel %vm526, %v514, %v529
      %v531 = vsel %vm525, %v528, %v530
      %v532 = vsel %vm524, %v511, %v514
      %v533 = vsel %vm527, %v520, 920167782
      %v534 = vsel %vm526, %v517, %v533
      %v535 = vsel %vm525, %v532, %v534
      %v536 = vsel %vm524, %v514, %v517
      %v537 = vsel %vm527, %v523, 1326507024
      %v538 = vsel %vm526, %v520, %v537
      %v539 = vsel %vm525, %v536, %v538
      %v540 = vshll.u32 %v500, 8
      %v541 = vmul.u32.u64.compose %v540, %v539
      %v542 = vextract.low.u32 %v541
      %v543 = vextract.high.u32 %v541
      %v544 = vmul.u32.u64.compose %v540, %v535
      %v545 = vextract.low.u32 %v544
      %v546 = vextract.high.u32 %v544
      %v547 = vmul.u32 %v540, %v531
      %v548 = vadd.s32 %v543, %v545
      %vm549 = vc.u32 %v543, %v545
      %v550 = vadd.s32 %v546, 1
      %v551 = vsel %vm549, %v550, %v546
      %v552 = vadd.s32 %v547, %v551
      %v553 = vadd.s32 %v552, 536870912
      %v554 = vshrl.u32 %v553, 30
      %v555 = vshll.u32 %v554, 30
      %v556 = vsub.s32 %v552, %v555
      %vm557 = vcmp.lt.s32.totalorder %v556, 0
      %v558 = vsub.s32 0, %v556
      %v559 = vsel %vm557, %v558, %v556
      %v560 = vclz %v559
      %v561 = vsub.s32 %v560, 2
      %vm562 = vcmp.gt.s32.totalorder 0, %v561
      %v563 = vsel %vm562, 0, %v561
      %v564 = vsub.s32 32, %v563
      %v565 = vshll.u32 %v556, %v563
      %v566 = vshrl.u32 %v548, %v564
      %v567 = vor.u32 %v565, %v566
      %v568 = vsub.s32 4294967266, %v563
      %v569 = vadd.s32 %v568, 127
      %v570 = vshll.u32 %v569, 23
      %v571 = vor.u32 4788187, %v570
      %v572 = vand.u32 2147483647, %v571
      %v574 = vcvt.s32.f32 %v567
      %v575 = vmul.f32 %v574, %v572
      %v576 = vxor.u32 %v575, 2147483648
      %v577 = vsel %vm494, %v576, %v575
      %v578 = vsub.s32 4, %v554
      %v579 = vsel %vm494, %v578, %v554
      %v580 = vsel %vm493, %v385, %v577
      %v581 = vsel %vm493, 0, %v579
      %v582 = vcosq.f32.pop %v580
      %v583 = vsinq.f32.pop %v580
      %vm584 = vweird.f32 %v385
      %v585 = vadd.s32 %v581, 3
      %v586 = vand.u32 %v585, 3
      %vm587 = vcmp.lt.s32.totalorder %v586, 2
      %vm588 = vcmp.eq.s32.totalorder %v586, 0
      %v589 = vxor.u32 %v583, 2147483648
      %v590 = vsel %vm588, %v582, %v589
      %vm591 = vcmp.eq.s32.totalorder %v586, 2
      %v592 = vxor.u32 %v582, 2147483648
      %v593 = vsel %vm591, %v592, %v583
      %v594 = vsel %vm587, %v590, %v593
      %v595 = vsel %vm584, nan, %v594
      %v596 = vand.u32 2147483647, %v386
      %vm597 = vcmp.le.f32.partialorder %v596, 0.7853982
      %vm598 = vcmp.lt.s32.totalorder %v386, 0
      %v599 = vand.u32 %v386, 2139095040
      %v600 = vshrl.u32 %v599, 23
      %v601 = vsub.s32 %v600, 127
      %v602 = vand.u32 2147483647, %v386
      %v603 = vand.u32 %v602, 8388607
      %v604 = vor.u32 %v603, 8388608
      %v605 = vsub.s32 0, %v604
      %v606 = vadd.s32 %v601, 1
      %vm607 = vcmp.gt.s32.totalorder %v606, 0
      %v608 = vsel %vm607, %v606, 0
      %v609 = vshrl.u32 %v608, 5
      %v610 = vand.u32 %v608, 31
      %v611 = vsub.s32 32, %v610
      %v612 = vshrl.u32 683565275, %v611
      %v613 = vshll.u32 683565275, %v610
      %v614 = vshrl.u32 2475754826, %v611
      %v615 = vor.u32 %v613, %v614
      %v616 = vshll.u32 2475754826, %v610
      %v617 = vshrl.u32 2131351028, %v611
      %v618 = vor.u32 %v616, %v617
      %v619 = vshll.u32 2131351028, %v610
      %v620 = vshrl.u32 2102212464, %v611
      %v621 = vor.u32 %v619, %v620
      %v622 = vshll.u32 2102212464, %v610
      %v623 = vshrl.u32 920167782, %v611
      %v624 = vor.u32 %v622, %v623
      %v625 = vshll.u32 920167782, %v610
      %v626 = vshrl.u32 1326507024, %v611
      %v627 = vor.u32 %v625, %v626
      %vm628 = vcmp.lt.s32.totalorder %v609, 1
      %vm629 = vcmp.lt.s32.totalorder %v609, 2
      %vm630 = vcmp.lt.s32.totalorder %v609, 3
      %vm631 = vcmp.lt.s32.totalorder %v609, 4
      %v632 = vsel %vm628, %v612, %v615
      %v633 = vsel %vm631, %v621, 2102212464
      %v634 = vsel %vm630, %v618, %v633
      %v635 = vsel %vm629, %v632, %v634
      %v636 = vsel %vm628, %v615, %v618
      %v637 = vsel %vm631, %v624, 920167782
      %v638 = vsel %vm630, %v621, %v637
      %v639 = vsel %vm629, %v636, %v638
      %v640 = vsel %vm628, %v618, %v621
      %v641 = vsel %vm631, %v627, 1326507024
      %v642 = vsel %vm630, %v624, %v641
      %v643 = vsel %vm629, %v640, %v642
      %v644 = vshll.u32 %v604, 8
      %v645 = vmul.u32.u64.compose %v644, %v643
      %v646 = vextract.low.u32 %v645
      %v647 = vextract.high.u32 %v645
      %v648 = vmul.u32.u64.compose %v644, %v639
      %v649 = vextract.low.u32 %v648
      %v650 = vextract.high.u32 %v648
      %v651 = vmul.u32 %v644, %v635
      %v652 = vadd.s32 %v647, %v649
      %vm653 = vc.u32 %v647, %v649
      %v654 = vadd.s32 %v650, 1
      %v655 = vsel %vm653, %v654, %v650
      %v656 = vadd.s32 %v651, %v655
      %v657 = vadd.s32 %v656, 536870912
      %v658 = vshrl.u32 %v657, 30
      %v659 = vshll.u32 %v658, 30
      %v660 = vsub.s32 %v656, %v659
      %vm661 = vcmp.lt.s32.totalorder %v660, 0
      %v662 = vsub.s32 0, %v660
      %v663 = vsel %vm661, %v662, %v660
      %v664 = vclz %v663
      %v665 = vsub.s32 %v664, 2
      %vm666 = vcmp.gt.s32.totalorder 0, %v665
      %v667 = vsel %vm666, 0, %v665
      %v668 = vsub.s32 32, %v667
      %v669 = vshll.u32 %v660, %v667
      %v670 = vshrl.u32 %v652, %v668
      %v671 = vor.u32 %v669, %v670
      %v672 = vsub.s32 4294967266, %v667
      %v673 = vadd.s32 %v672, 127
      %v674 = vshll.u32 %v673, 23
      %v675 = vor.u32 4788187, %v674
      %v676 = vand.u32 2147483647, %v675
      %v678 = vcvt.s32.f32 %v671
      %v679 = vmul.f32 %v678, %v676
      %v680 = vxor.u32 %v679, 2147483648
      %v681 = vsel %vm598, %v680, %v679
      %v682 = vsub.s32 4, %v658
      %v683 = vsel %vm598, %v682, %v658
      %v684 = vsel %vm597, %v386, %v681
      %v685 = vsel %vm597, 0, %v683
      %v686 = vcosq.f32.pop %v684
      %v687 = vsinq.f32.pop %v684
      %vm688 = vweird.f32 %v386
      %v689 = vadd.s32 %v685, 3
      %v690 = vand.u32 %v689, 3
      %vm691 = vcmp.lt.s32.totalorder %v690, 2
      %vm692 = vcmp.eq.s32.totalorder %v690, 0
      %v693 = vxor.u32 %v687, 2147483648
      %v694 = vsel %vm692, %v686, %v693
      %vm695 = vcmp.eq.s32.totalorder %v690, 2
      %v696 = vxor.u32 %v686, 2147483648
      %v697 = vsel %vm695, %v696, %v687
      %v698 = vsel %vm691, %v694, %v697
      %v699 = vsel %vm688, nan, %v698
      %v700 = vand.u32 2147483647, %v387
      %vm701 = vcmp.le.f32.partialorder %v700, 0.7853982
      %vm702 = vcmp.lt.s32.totalorder %v387, 0
      %v703 = vand.u32 %v387, 2139095040
      %v704 = vshrl.u32 %v703, 23
      %v705 = vsub.s32 %v704, 127
      %v706 = vand.u32 2147483647, %v387
      %v707 = vand.u32 %v706, 8388607
      %v708 = vor.u32 %v707, 8388608
      %v709 = vsub.s32 0, %v708
      %v710 = vadd.s32 %v705, 1
      %vm711 = vcmp.gt.s32.totalorder %v710, 0
      %v712 = vsel %vm711, %v710, 0
      %v713 = vshrl.u32 %v712, 5
      %v714 = vand.u32 %v712, 31
      %v715 = vsub.s32 32, %v714
      %v716 = vshrl.u32 683565275, %v715
      %v717 = vshll.u32 683565275, %v714
      %v718 = vshrl.u32 2475754826, %v715
      %v719 = vor.u32 %v717, %v718
      %v720 = vshll.u32 2475754826, %v714
      %v721 = vshrl.u32 2131351028, %v715
      %v722 = vor.u32 %v720, %v721
      %v723 = vshll.u32 2131351028, %v714
      %v724 = vshrl.u32 2102212464, %v715
      %v725 = vor.u32 %v723, %v724
      %v726 = vshll.u32 2102212464, %v714
      %v727 = vshrl.u32 920167782, %v715
      %v728 = vor.u32 %v726, %v727
      %v729 = vshll.u32 920167782, %v714
      %v730 = vshrl.u32 1326507024, %v715
      %v731 = vor.u32 %v729, %v730
      %vm732 = vcmp.lt.s32.totalorder %v713, 1
      %vm733 = vcmp.lt.s32.totalorder %v713, 2
      %vm734 = vcmp.lt.s32.totalorder %v713, 3
      %vm735 = vcmp.lt.s32.totalorder %v713, 4
      %v736 = vsel %vm732, %v716, %v719
      %v737 = vsel %vm735, %v725, 2102212464
      %v738 = vsel %vm734, %v722, %v737
      %v739 = vsel %vm733, %v736, %v738
      %v740 = vsel %vm732, %v719, %v722
      %v741 = vsel %vm735, %v728, 920167782
      %v742 = vsel %vm734, %v725, %v741
      %v743 = vsel %vm733, %v740, %v742
      %v744 = vsel %vm732, %v722, %v725
      %v745 = vsel %vm735, %v731, 1326507024
      %v746 = vsel %vm734, %v728, %v745
      %v747 = vsel %vm733, %v744, %v746
      %v748 = vshll.u32 %v708, 8
      %v749 = vmul.u32.u64.compose %v748, %v747
      %v750 = vextract.low.u32 %v749
      %v751 = vextract.high.u32 %v749
      %v752 = vmul.u32.u64.compose %v748, %v743
      %v753 = vextract.low.u32 %v752
      %v754 = vextract.high.u32 %v752
      %v755 = vmul.u32 %v748, %v739
      %v756 = vadd.s32 %v751, %v753
      %vm757 = vc.u32 %v751, %v753
      %v758 = vadd.s32 %v754, 1
      %v759 = vsel %vm757, %v758, %v754
      %v760 = vadd.s32 %v755, %v759
      %v761 = vadd.s32 %v760, 536870912
      %v762 = vshrl.u32 %v761, 30
      %v763 = vshll.u32 %v762, 30
      %v764 = vsub.s32 %v760, %v763
      %vm765 = vcmp.lt.s32.totalorder %v764, 0
      %v766 = vsub.s32 0, %v764
      %v767 = vsel %vm765, %v766, %v764
      %v768 = vclz %v767
      %v769 = vsub.s32 %v768, 2
      %vm770 = vcmp.gt.s32.totalorder 0, %v769
      %v771 = vsel %vm770, 0, %v769
      %v772 = vsub.s32 32, %v771
      %v773 = vshll.u32 %v764, %v771
      %v774 = vshrl.u32 %v756, %v772
      %v775 = vor.u32 %v773, %v774
      %v776 = vsub.s32 4294967266, %v771
      %v777 = vadd.s32 %v776, 127
      %v778 = vshll.u32 %v777, 23
      %v779 = vor.u32 4788187, %v778
      %v780 = vand.u32 2147483647, %v779
      %v782 = vcvt.s32.f32 %v775
      %v783 = vmul.f32 %v782, %v780
      %v784 = vxor.u32 %v783, 2147483648
      %v785 = vsel %vm702, %v784, %v783
      %v786 = vsub.s32 4, %v762
      %v787 = vsel %vm702, %v786, %v762
      %v788 = vsel %vm701, %v387, %v785
      %v789 = vsel %vm701, 0, %v787
      %v790 = vcosq.f32.pop %v788
      %v791 = vsinq.f32.pop %v788
      %vm792 = vweird.f32 %v387
      %v793 = vadd.s32 %v789, 3
      %v794 = vand.u32 %v793, 3
      %vm795 = vcmp.lt.s32.totalorder %v794, 2
      %vm796 = vcmp.eq.s32.totalorder %v794, 0
      %v797 = vxor.u32 %v791, 2147483648
      %v798 = vsel %vm796, %v790, %v797
      %vm799 = vcmp.eq.s32.totalorder %v794, 2
      %v800 = vxor.u32 %v790, 2147483648
      %v801 = vsel %vm799, %v800, %v791
      %v802 = vsel %vm795, %v798, %v801
      %v803 = vsel %vm792, nan, %v802
      %vm804 = vcmask 130048
      %805 = vst.msk [vmem:[%s252] sm:$0xff] %vm804, %v491
      %806 = vst.msk [vmem:[%s252 + $0x8] sm:$0xff] %vm804, %v595
      %807 = vst.msk [vmem:[%s252 + $0x10] sm:$0xff] %vm804, %v699
      %808 = vst.msk [vmem:[%s252 + $0x18] sm:$0xff] %vm804, %v803
      %p809 = scmp.lt.s32.totalorder %s20, 1
      %s810 = scalar_select %p809, %s20, 1
      %p811 = scmp.lt.s32.totalorder %s21, 0
      %s812 = scalar_select %p811, %s21, 0
      %s813 = smul.addr %s810, 4
      %s814 = sadd.s32 %s812, %s813
      %s815 = smul.addr %s814, 8
      %s816 = scalar_lea.vmem %s5, %s815
      // Predicated region
      $region41: #{tpu_custom_call.1} parent=39 // pred_check
        %p817 = pneg %p160
      $region42: #{tpu_custom_call.1} parent=39 // pred_check_branch
        %819 = sbr.rel (%p817) target = $region44
      $region43: #{tpu_custom_call.1} parent=39 // pred_region
        _
      $region44: #{tpu_custom_call.1} parent=39 // pred_fallthru
        _
    $region40: #{tpu_custom_call.1} parent=5 // pred_fallthru
      _
    %p820 = scmp.le.s32.totalorder 2, %s11
    // Predicated region
    $region45: #{tpu_custom_call.1} parent=5 // pred_check
      %p821 = pneg %p820
    $region46: #{tpu_custom_call.1} parent=5 // pred_check_branch
      %823 = sbr.rel (%p821) target = $region48
    $region47: #{tpu_custom_call.1} parent=5 // pred_region
      %s824 = ssub.s32 %s11, 2
      // Predicated region
      $region49: #{tpu_custom_call.1} parent=47 // pred_check
        %p825 = pneg %p166
      $region50: #{tpu_custom_call.1} parent=47 // pred_check_branch
        %827 = sbr.rel (%p825) target = $region52
      $region51: #{tpu_custom_call.1} parent=47 // pred_region
        %p828 = scmp.lt.s32.totalorder %s22, 1
        %s829 = scalar_select %p828, %s22, 1
        %p830 = scmp.lt.s32.totalorder %s23, 0
        %s831 = scalar_select %p830, %s23, 0
        %s832 = smul.addr %s829, 4
        %s833 = sadd.s32 %s831, %s832
        %s834 = smul.addr %s833, 8
        %s835 = scalar_lea.vmem %s5, %s834
      $region52: #{tpu_custom_call.1} parent=47 // pred_fallthru
        _
    $region48: #{tpu_custom_call.1} parent=5 // pred_fallthru
      _
  $region6: #{tpu_custom_call.1} parent=0 // loop_footer
    %s15 = sadd.s32 1, %s11
  $region7: #{tpu_custom_call.1} parent=0 // loop_footer_branch
    %10 = sbr.rel target = $region3
  $region8: #{tpu_custom_call.1} parent=0 // loop_exit
    _

</llo_original>
